<compile_context>
chip_gen: v7x
topology: tpu7x:2x2x1
jax: 0.10.0
libtpu: 0.0.40
codegen_flags: <defaults>
</compile_context>

<pallas_src>
import jax
import jax.numpy as jnp
from jax.experimental import pallas as pl
from jax.experimental.pallas import tpu as pltpu


def roadmap_kernel(d_ref, pm_ref, out_ref):
    """d_ref, pm_ref: (P, N) in VMEM -- one loss instance per sublane row.
    out_ref: (P, 128) f32 in VMEM -- per-instance loss broadcast across lanes."""
    d = d_ref[...].astype(jnp.float32)        # (P, N) similarities
    pm = pm_ref[...].astype(jnp.float32)      # (P, N) positive mask in {0, 1}
    n = jnp.float32(d_ref.shape[1])           # static N

    # Three O(N) cross-lane reductions per step (the only real work).  Kept as
    # separate sums: stacking [d, d*pm, pm] to fuse them into one jnp.sum would
    # add (P, N) VMEM copies that cost more than the saved XLU issue slots.
    s = jnp.sum(d, axis=-1, keepdims=True)             # (P, 1)  S = sum_j d[j]
    dc = d - s * (1.0 / n)                              # centered: exact, well conditioned
    s_pos = jnp.sum(dc * pm, axis=-1, keepdims=True)    # (P, 1)
    n_pos = jnp.sum(pm, axis=-1, keepdims=True)         # (P, 1)

    # Rank-1 collapse of D[i, j] = d[j] - d[i] (diag already 0, no mask and no
    # (N, N) materialization needed).  With centered d, sum_j dc == 0 up to f32
    # rounding, so R = 1 - N*dc avoids the 1 + S - N*d cancellation.
    r = 1.0 - n * dc                                     # (P, N)  R[i]
    r_pos = (1.0 + s_pos - n_pos * dc) * pm              # (P, N)  R_pos[i]

    # Exact divide for parity with the reference; switch to
    # r_pos * pl.reciprocal(r, approx=True) if ~1e-3 rel error is acceptable.
    ratio = jnp.sum(r_pos / r, axis=-1, keepdims=True)   # (P, 1)
    ap = ratio / jnp.maximum(n_pos, 1.0)                 # NaN-free even if n_pos == 0
    ap = jnp.where(n_pos == 0.0, jnp.float32(1e-4), ap)  # PyTorch early-return guard

    # Lane-dense, fully unmasked (P, 128) store; the wrapper reads column 0.
    out_ref[...] = jnp.broadcast_to(ap, out_ref.shape)


def roadmap_forward_batched(d, pm, *, instances_per_step=8):
    """Batched Roadmap loss.  d: (B, N) similarities, pm: (B, N) 0/1 positive
    mask.  Returns (B,) per-instance losses.

    For very large N pass d / pm as bf16 (the kernel upcasts; all math stays
    f32) to halve the HBM DMA bytes.
    """
    B, N = d.shape
    P = max(8, (int(instances_per_step) // 8) * 8)   # sublane-aligned pack size
    B_pad = pl.cdiv(B, P) * P
    if B_pad != B:
        d = jnp.pad(d, ((0, B_pad - B), (0, 0)))     # padded rows have n_pos == 0
        pm = jnp.pad(pm, ((0, B_pad - B), (0, 0)))

    # TODO(synk): for N large enough that a (P, N) block approaches the scoped
    # VMEM limit (16 MiB v5e / 32 MiB v6e / 64 MiB physical v7x), add a
    # lane-tiled reduction grid over N and/or raise vmem_limit_bytes.
    out = pl.pallas_call(
        roadmap_kernel,
        out_shape=jax.ShapeDtypeStruct((B_pad, 128), jnp.float32),
        grid_spec=pltpu.PrefetchScalarGridSpec(
            num_scalar_prefetch=0,
            grid=(B_pad // P,),
            in_specs=[
                pl.BlockSpec((P, N), lambda i: (i, 0)),
                pl.BlockSpec((P, N), lambda i: (i, 0)),
            ],
            out_specs=pl.BlockSpec((P, 128), lambda i: (i, 0)),
        ),
        compiler_params=pltpu.CompilerParams(
            # Instances are independent -> shard the grid across both
            # TensorCores on v7x (harmless on v5e/v6e).
            dimension_semantics=("parallel",)),
    )(d, pm)
    return out[:B, 0]


def roadmap_forward(sim_all, pos_mask_, gt_iou=None):
    """Pallas implementation of Roadmap.forward(sim_all, pos_mask_, gt_iou)."""
    del gt_iou  # unused by the PyTorch forward (dead w.r.t. the returned value)
    N = sim_all.shape[0]
    d = jnp.reshape(sim_all.astype(jnp.float32), (1, N))    # metadata-only reshape
    pm = pos_mask_[:, 1:].astype(jnp.float32).reshape(1, N)  # slice copies anyway
    return roadmap_forward_batched(d, pm)[0]


def _ref_forward(sim_all, pos_mask_):
    """Pure-JAX reference mirroring the live O(N^2) path of the PyTorch forward."""
    N = sim_all.shape[0]
    d = jnp.reshape(sim_all.astype(jnp.float32), (1, N))
    pm = pos_mask_[:, 1:].astype(jnp.float32)          # (1, N)
    D = d - d.T                                        # (N, N), D[i, j] = d[j] - d[i]
    D_ = D * (1.0 - jnp.eye(N, dtype=jnp.float32))
    R = 1.0 + jnp.sum(D_, axis=1)                      # (N,)
    R_pos = (1.0 + jnp.sum(D_ * pm, axis=1)) * pm[0]   # (N,)
    n_pos = jnp.sum(pm)
    ap = jnp.sum(R_pos / R) / jnp.maximum(n_pos, 1.0)
    return jnp.where(n_pos == 0.0, jnp.float32(1e-4), ap)


if __name__ == "__main__":
    key = jax.random.PRNGKey(0)
    k1, k2, k3, k4, k5 = jax.random.split(key, 5)

    # --- single instance, matching the PyTorch module signature ---
    N = 16
    # Small-magnitude similarities keep R = 1 + S - N*d well away from zero so
    # the kernel-vs-reference comparison is numerically well conditioned.
    sim_all = 0.01 * jax.random.normal(k1, (N, 1), dtype=jnp.float32)
    pos_mask_ = jax.random.bernoulli(k2, 0.4, (1, N + 1))
    gt_iou = jax.random.uniform(k3, (1, N), dtype=jnp.float32)  # unused by forward

    out = roadmap_forward(sim_all, pos_mask_, gt_iou)
    out = jax.block_until_ready(out)
    ref = _ref_forward(sim_all, pos_mask_)
    assert jnp.allclose(out, ref, rtol=1e-4, atol=1e-5), (out, ref)

    # --- batched instances: one pallas_call, sublane-packed, parallel grid ---
    B = 20
    sims_b = 0.01 * jax.random.normal(k4, (B, N), dtype=jnp.float32)
    masks_b = jax.random.bernoulli(k5, 0.4, (B, N + 1))
    masks_b = masks_b.at[3, 1:].set(False)            # exercise the n_pos == 0 guard

    losses = roadmap_forward_batched(sims_b, masks_b[:, 1:].astype(jnp.float32))
    losses = jax.block_until_ready(losses)
    refs = jnp.stack([_ref_forward(sims_b[b].reshape(N, 1), masks_b[b:b + 1])
                      for b in range(B)])
    assert losses.shape == (B,)
    assert jnp.allclose(losses, refs, rtol=1e-4, atol=1e-5), (losses, refs)

    print("KERNEL_OK")
</pallas_src>

<mosaic_0001>
module attributes {stable_mosaic.version = 11 : i64} {
  func.func @roadmap_kernel(%arg0: i32, %arg1: memref<8x16xf32, #tpu.memory_space<vmem>>, %arg2: memref<8x16xf32, #tpu.memory_space<vmem>>, %arg3: memref<8x128xf32, #tpu.memory_space<vmem>>) attributes {dimension_semantics = [#tpu.dimension_semantics<parallel>], iteration_bounds = array<i64: 1>, scalar_prefetch = 0 : i64, scratch_operands = 0 : i64, tpu.core_type = #tpu.core_type<tc>, window_params = [{transform_indices = @transform_0, window_bounds = array<i64: 8, 16>}, {transform_indices = @transform_1, window_bounds = array<i64: 8, 16>}, {transform_indices = @transform_2, window_bounds = array<i64: 8, 128>}]} {
    %c0 = arith.constant 0 : index
    %c0_0 = arith.constant 0 : index
    %0 = vector.load %arg1[%c0, %c0_0] : memref<8x16xf32, #tpu.memory_space<vmem>>, vector<8x16xf32>
    %c0_1 = arith.constant 0 : index
    %c0_2 = arith.constant 0 : index
    %1 = vector.load %arg2[%c0_1, %c0_2] : memref<8x16xf32, #tpu.memory_space<vmem>>, vector<8x16xf32>
    %cst = arith.constant dense<0.000000e+00> : vector<8xf32>
    %2 = vector.multi_reduction <add>, %0, %cst [1] : vector<8x16xf32> to vector<8xf32>
    %3 = vector.shape_cast %2 : vector<8xf32> to vector<8x1xf32>
    %cst_3 = arith.constant 1.000000e+00 : f32
    %cst_4 = arith.constant 1.600000e+01 : f32
    %4 = arith.divf %cst_3, %cst_4 : f32
    %5 = vector.broadcast %4 : f32 to vector<8x1xf32>
    %6 = arith.mulf %3, %5 : vector<8x1xf32>
    %7 = vector.broadcast %6 : vector<8x1xf32> to vector<8x16xf32>
    %8 = arith.subf %0, %7 : vector<8x16xf32>
    %9 = arith.mulf %8, %1 : vector<8x16xf32>
    %cst_5 = arith.constant dense<0.000000e+00> : vector<8xf32>
    %10 = vector.multi_reduction <add>, %9, %cst_5 [1] : vector<8x16xf32> to vector<8xf32>
    %11 = vector.shape_cast %10 : vector<8xf32> to vector<8x1xf32>
    %cst_6 = arith.constant dense<0.000000e+00> : vector<8xf32>
    %12 = vector.multi_reduction <add>, %1, %cst_6 [1] : vector<8x16xf32> to vector<8xf32>
    %13 = vector.shape_cast %12 : vector<8xf32> to vector<8x1xf32>
    %cst_7 = arith.constant 1.600000e+01 : f32
    %14 = vector.broadcast %cst_7 : f32 to vector<8x16xf32>
    %15 = arith.mulf %14, %8 : vector<8x16xf32>
    %cst_8 = arith.constant 1.000000e+00 : f32
    %16 = vector.broadcast %cst_8 : f32 to vector<8x16xf32>
    %17 = arith.subf %16, %15 : vector<8x16xf32>
    %cst_9 = arith.constant 1.000000e+00 : f32
    %18 = vector.broadcast %cst_9 : f32 to vector<8x1xf32>
    %19 = arith.addf %18, %11 : vector<8x1xf32>
    %20 = vector.broadcast %13 : vector<8x1xf32> to vector<8x16xf32>
    %21 = arith.mulf %20, %8 : vector<8x16xf32>
    %22 = vector.broadcast %19 : vector<8x1xf32> to vector<8x16xf32>
    %23 = arith.subf %22, %21 : vector<8x16xf32>
    %24 = arith.mulf %23, %1 : vector<8x16xf32>
    %25 = arith.divf %24, %17 : vector<8x16xf32>
    %cst_10 = arith.constant dense<0.000000e+00> : vector<8xf32>
    %26 = vector.multi_reduction <add>, %25, %cst_10 [1] : vector<8x16xf32> to vector<8xf32>
    %27 = vector.shape_cast %26 : vector<8xf32> to vector<8x1xf32>
    %cst_11 = arith.constant 1.000000e+00 : f32
    %28 = vector.broadcast %cst_11 : f32 to vector<8x1xf32>
    %29 = arith.maximumf %13, %28 : vector<8x1xf32>
    %30 = arith.divf %27, %29 : vector<8x1xf32>
    %cst_12 = arith.constant 0.000000e+00 : f32
    %31 = vector.broadcast %cst_12 : f32 to vector<8x1xf32>
    %32 = arith.cmpf oeq, %13, %31 : vector<8x1xf32>
    %cst_13 = arith.constant 9.99999974E-5 : f32
    %33 = vector.broadcast %cst_13 : f32 to vector<8x1xf32>
    %34 = arith.select %32, %33, %30 : vector<8x1xi1>, vector<8x1xf32>
    %35 = vector.shape_cast %34 : vector<8x1xf32> to vector<8x1xf32>
    %36 = vector.broadcast %35 : vector<8x1xf32> to vector<8x128xf32>
    %c0_14 = arith.constant 0 : index
    %c0_15 = arith.constant 0 : index
    %37 = vector.load %arg3[%c0_14, %c0_15] : memref<8x128xf32, #tpu.memory_space<vmem>>, vector<8x128xf32>
    tpu.vector_store %arg3[%c0_14, %c0_15], %36 {strides = array<i32>} : memref<8x128xf32, #tpu.memory_space<vmem>>, vector<8x128xf32>,
    return
  }
  func.func @transform_0(%arg0: i32) -> (i32, i32) {
    %c0_i32 = arith.constant 0 : i32
    %c0_i32_0 = arith.constant 0 : i32
    return %arg0, %c0_i32 : i32, i32
  }
  func.func @transform_1(%arg0: i32) -> (i32, i32) {
    %c0_i32 = arith.constant 0 : i32
    %c0_i32_0 = arith.constant 0 : i32
    return %arg0, %c0_i32 : i32, i32
  }
  func.func @transform_2(%arg0: i32) -> (i32, i32) {
    %c0_i32 = arith.constant 0 : i32
    %c0_i32_0 = arith.constant 0 : i32
    return %arg0, %c0_i32 : i32, i32
  }
}

</mosaic_0001>

<llo_original>
// kernel: tpu_custom_call.1
$region0: #{tpu_custom_call.1}
  #allocation0 [shape = 'u32[]', space=smem, size = 0x4, offset = 0x4, fixed_abs, tag = 'smem constant byte address 0x4 - core index']
  #allocation1 [shape = 'u32[144,128]{1,0:T(1,128)}', space=vmem, size = 0x12000, scoped, tag = 'internal scratch']
  %s0 = inlined_call_operand.hbm [shape: f32[8,16], index: 0, kind: input, shape index: {}]
  %s1 = inlined_call_operand.hbm [shape: f32[8,16], index: 1, kind: input, shape index: {}]
  %s2 = inlined_call_operand.hbm [shape: f32[8,128], index: 2, kind: output, shape index: {}]
  %s3 = sld [smem:[#allocation0]]
  $region26: #{tpu_custom_call.1} parent=0
    _
  %s5 = ssub.s32 1, %s3
  %s6 = scalar_select 0, %s5, %s3
  $region1: #{tpu_custom_call.1} parent=0
    #allocation2 [shape = 'u8[4096]{0}', space=vmem, size = 0x1000, scoped, tag = 'input window, operand 0, single buffered']
    #allocation3 [shape = 's32[1]{0}', space=sflag, size = 0x4, scoped, tag = 'scoped memory for tpu_custom_call.1']
    #allocation4 [shape = 's32[1]{0}', space=sflag, size = 0x4, scoped, tag = 'scoped memory for tpu_custom_call.1']
    #allocation5 [shape = 'u8[4096]{0}', space=vmem, size = 0x1000, scoped, tag = 'input window, operand 1, single buffered']
    #allocation6 [shape = 's32[1]{0}', space=sflag, size = 0x4, scoped, tag = 'scoped memory for tpu_custom_call.1']
    #allocation7 [shape = 'u8[4096]{0}', space=vmem, size = 0x1000, scoped, tag = 'output window, operand 0, single buffered']
    %7 = vsyncpa [#allocation3], 0
    %8 = vsyncpa [#allocation6], 0
    %9 = vsyncpa [#allocation4], 0
    // Predicated region
    $region2: #{tpu_custom_call.1} parent=1 // pred_check
      _
    $region3: #{tpu_custom_call.1} parent=1 // pred_check_branch
      %11 = sbr.rel (0) target = $region5
    $region4: #{tpu_custom_call.1} parent=1 // pred_region
      %s13 = ssub.s32 128, 128
      %14 = vsyncadd [#allocation3], %s13
      %s16 = sshll.u32 [#allocation2], 4
      %s17 = int_to_ptr.vmem [resolvable:$true] %s16
      %19 = dma.hbm_to_vmem [thread:$0]  %s0, 128, %s17, [#allocation3]
    $region5: #{tpu_custom_call.1} parent=1 // pred_fallthru
      _
    // Predicated region
    $region6: #{tpu_custom_call.1} parent=1 // pred_check
      _
    $region7: #{tpu_custom_call.1} parent=1 // pred_check_branch
      %21 = sbr.rel (0) target = $region9
    $region8: #{tpu_custom_call.1} parent=1 // pred_region
      %s23 = ssub.s32 128, 128
      %24 = vsyncadd [#allocation6], %s23
      %s26 = sshll.u32 [#allocation5], 4
      %s27 = int_to_ptr.vmem [resolvable:$true] %s26
      %29 = dma.hbm_to_vmem [thread:$0]  %s1, 128, %s27, [#allocation6]
    $region9: #{tpu_custom_call.1} parent=1 // pred_fallthru
      _
    // Predicated region
    $region10: #{tpu_custom_call.1} parent=1 // pred_check
      _
    $region11: #{tpu_custom_call.1} parent=1 // pred_check_branch
      %31 = sbr.rel (0) target = $region13
    $region12: #{tpu_custom_call.1} parent=1 // pred_region
      %32 = dma.done [#allocation3], 128
    $region13: #{tpu_custom_call.1} parent=1 // pred_fallthru
      _
    // Predicated region
    $region14: #{tpu_custom_call.1} parent=1 // pred_check
      _
    $region15: #{tpu_custom_call.1} parent=1 // pred_check_branch
      %34 = sbr.rel (0) target = $region17
    $region16: #{tpu_custom_call.1} parent=1 // pred_region
      %35 = dma.done [#allocation6], 128
    $region17: #{tpu_custom_call.1} parent=1 // pred_fallthru
      _
    %v36 = vld [vmem:[#allocation2] sm:$0xff]
    %v37 = vld [vmem:[#allocation5] sm:$0xff]
    %vm38 = vcmask 130048
    %v39 = vsel %vm38, %v36, 0.0
    %40 = vadd.xlane.f32.xlu0 %v39
    %v41 = vpop.xlane.xlu0 %40
    %v42 = vmul.f32 %v41, 0.0625
    %v43 = vsub.f32 %v36, %v42
    %v44 = vmul.f32 %v43, %v37
    %v45 = vsel %vm38, %v44, 0.0
    %46 = vadd.xlane.f32.xlu0 %v45
    %v47 = vpop.xlane.xlu0 %46
    %v48 = vsel %vm38, %v37, 0.0
    %49 = vadd.xlane.f32.xlu0 %v48
    %v50 = vpop.xlane.xlu0 %49
    %v51 = vmul.f32 %v43, 16.0
    %v52 = vsub.f32 1.0, %v51
    %v53 = vadd.f32 %v47, 1.0
    %v54 = vmul.f32 %v50, %v43
    %v55 = vsub.f32 %v53, %v54
    %v56 = vmul.f32 %v55, %v37
    %v57 = vrcp.pop %v52
    %v58 = vmul.f32 %v56, %v57
    %v59 = vsel %vm38, %v58, 0.0
    %60 = vadd.xlane.f32.xlu0 %v59
    %v61 = vpop.xlane.xlu0 %60
    %v62 = vmax.f32 %v50, 1.0
    %v63 = vrcp.pop %v62
    %v64 = vmul.f32 %v61, %v63
    %vm65 = vcmp.eq.f32.partialorder %v50, 0.0
    %v66 = vsel %vm65, 0.0001, %v64
    %67 = vst [vmem:[#allocation7] sm:$0xff] %v66
    // Predicated region
    $region18: #{tpu_custom_call.1} parent=1 // pred_check
      _
    $region19: #{tpu_custom_call.1} parent=1 // pred_check_branch
      %69 = sbr.rel (0) target = $region21
    $region20: #{tpu_custom_call.1} parent=1 // pred_region
      %s71 = ssub.s32 128, 128
      %72 = vsyncadd [#allocation4], %s71
      %s74 = sshll.u32 [#allocation7], 4
      %s75 = int_to_ptr.vmem [resolvable:$true] %s74
      %77 = dma.vmem_to_hbm [thread:$0]  %s75, 128, %s2, [#allocation4]
    $region21: #{tpu_custom_call.1} parent=1 // pred_fallthru
      _
    // Predicated region
    $region22: #{tpu_custom_call.1} parent=1 // pred_check
      _
    $region23: #{tpu_custom_call.1} parent=1 // pred_check_branch
      %79 = sbr.rel (0) target = $region25
    $region24: #{tpu_custom_call.1} parent=1 // pred_region
      %80 = dma.done [#allocation4], 128
    $region25: #{tpu_custom_call.1} parent=1 // pred_fallthru
      _
    %81 = vsyncpa [#allocation3], 1
    %82 = vsyncpa [#allocation6], 1
    %83 = vsyncpa [#allocation4], 1

</llo_original>
